<compile_context>
chip_gen: v6e
topology: v6e:2x2x1
jax: 0.10.0
libtpu: 0.0.40
codegen_flags: <defaults>
</compile_context>

<pallas_src>
import functools

import jax
import jax.numpy as jnp
from jax.experimental import pallas as pl
from jax.experimental.pallas import tpu as pltpu


def _int_pow(x, n):
    """x**n for a static non-negative integer n, via plain VPU multiplies."""
    result = None
    base = x
    while n > 0:
        if n & 1:
            result = base if result is None else result * base
        n >>= 1
        if n:
            base = base * base
    return jnp.ones_like(x) if result is None else result


def _focal_loss_kernel(preds_ref, labels_ref, out_ref, *, gamma, alpha_vals,
                       num_classes, tile_sub):
    # preds_ref : (num_classes, tile_sub, 128)  original dtype
    # labels_ref: (tile_sub, 128)               int32 (-1 marks padded rows)
    # out_ref   : (1, 8, 128)                   f32 per-block partial sums
    lbl = labels_ref[...]

    # Explicit per-class slices (static sublane offsets on the ref -> cheap
    # vlds); everything below is elementwise on dense (tile_sub, 128) slabs.
    xs = [preds_ref[k].astype(jnp.float32) for k in range(num_classes)]

    row_max = xs[0]
    for x in xs[1:]:
        row_max = jnp.maximum(row_max, x)

    es = [jnp.exp(x - row_max) for x in xs]
    denom = es[0]
    for e in es[1:]:
        denom = denom + e

    # Gather logit / exp / alpha at the label class via where-chains
    # (alpha values are compile-time constants).
    x_t = xs[0]
    e_t = es[0]
    a_t = jnp.float32(alpha_vals[0])
    for k in range(1, num_classes):
        sel = lbl == k
        x_t = jnp.where(sel, xs[k], x_t)
        e_t = jnp.where(sel, es[k], e_t)
        a_t = jnp.where(sel, jnp.float32(alpha_vals[k]), a_t)

    logp_t = (x_t - row_max) - jnp.log(denom)    # log softmax at label
    p_t = e_t / denom                            # softmax at label (no 2nd exp)

    one_minus_p = 1.0 - p_t
    g = float(gamma)
    if g.is_integer() and g >= 0:
        focal = _int_pow(one_minus_p, int(g))    # VPU multiplies
    else:
        focal = one_minus_p ** g                 # general float power

    loss = a_t * focal * (-logp_t)               # (tile_sub, 128)
    loss = jnp.where(lbl >= 0, loss, 0.0)        # kill padded tail rows

    # Fold sublane groups of 8 with vreg-aligned VPU adds (no XLU reduce);
    # the final reduction to a scalar happens once, in the wrapper.
    partial = jnp.sum(loss.reshape(tile_sub // 8, 8, 128), axis=0)  # (8, 128)
    out_ref[...] = partial.reshape(1, 8, 128)


def focal_loss(preds, labels, *, alpha=0.25, gamma=2, num_classes=3,
               size_average=True, block_rows=262144):
    """Pallas TPU focal loss.

    preds: [B, N, C] or [B, C] floats (any float dtype); labels: [B, N] or [B].
    Returns a scalar f32 (mean over rows if size_average else sum).
    """
    # ---- alpha setup (matches FocalLoss.__init__) ----
    if isinstance(alpha, (list, tuple)):
        assert len(alpha) == num_classes
        alpha_vals = tuple(float(a) for a in alpha)
    else:
        assert alpha < 1
        # PyTorch module quirk: alpha for class 0, 1-alpha for all others.
        alpha_vals = (float(alpha),) + (1.0 - float(alpha),) * (num_classes - 1)

    preds2d = preds.reshape(-1, preds.shape[-1])
    labels1d = labels.reshape(-1).astype(jnp.int32)
    m, c = preds2d.shape
    assert c == num_classes

    itemsize = preds2d.dtype.itemsize

    # ---- tile size: real (lane-dense) block bytes, clamped to a VMEM budget ----
    # Per 128-row sublane group, double-buffered input bytes:
    per_sub_bytes = 2 * 128 * (num_classes * itemsize + 4)
    budget_sub = max(8, ((12 << 20) // per_sub_bytes) // 8 * 8)   # ~12 MiB inputs
    tile_sub = max(8, (block_rows // 128) // 8 * 8)
    tile_sub = min(tile_sub, budget_sub)
    # Clamp to the data (no point tiling past the padded row count).
    need_sub = -(-m // 128)
    tile_sub = min(tile_sub, max(8, -(-need_sub // 8) * 8))

    rows_per_block = tile_sub * 128
    num_blocks = -(-m // rows_per_block)
    mp = num_blocks * rows_per_block
    pad = mp - m

    # ---- glue: pad + transpose to the lane-dense [C, Mp//128, 128] layout ----
    preds_t = jnp.pad(preds2d, ((0, pad), (0, 0))).T.reshape(
        num_classes, mp // 128, 128)
    labels_t = jnp.pad(labels1d, (0, pad), constant_values=-1).reshape(
        mp // 128, 128)

    kernel = functools.partial(
        _focal_loss_kernel, gamma=gamma, alpha_vals=alpha_vals,
        num_classes=num_classes, tile_sub=tile_sub)

    # Real VMEM need: double-buffered inputs + (tiny) output + headroom.
    needed = (2 * num_classes * tile_sub * 128 * itemsize
              + 2 * tile_sub * 128 * 4
              + 2 * 8 * 128 * 4)
    vmem_limit = int(min(max(needed + (4 << 20), 16 << 20), 56 << 20))

    partials = pl.pallas_call(
        kernel,
        out_shape=jax.ShapeDtypeStruct((num_blocks, 8, 128), jnp.float32),
        grid_spec=pltpu.PrefetchScalarGridSpec(
            num_scalar_prefetch=0,
            grid=(num_blocks,),
            in_specs=[
                pl.BlockSpec((num_classes, tile_sub, 128),
                             lambda i: (0, i, 0)),
                pl.BlockSpec((tile_sub, 128), lambda i: (i, 0)),
            ],
            out_specs=pl.BlockSpec((1, 8, 128), lambda i: (i, 0, 0)),
        ),
        compiler_params=pltpu.CompilerParams(
            dimension_semantics=("parallel",),   # lets v7x split blocks on 2 TCs
            vmem_limit_bytes=vmem_limit),
    )(preds_t, labels_t)

    total = jnp.sum(partials)
    return total / m if size_average else total


def _focal_loss_ref(preds, labels, *, alpha=0.25, gamma=2, num_classes=3,
                    size_average=True):
    """Pure-JAX reference mirroring the PyTorch forward."""
    if isinstance(alpha, (list, tuple)):
        alpha_vec = jnp.asarray(alpha, jnp.float32)
    else:
        alpha_vec = jnp.concatenate([
            jnp.full((1,), alpha, jnp.float32),
            jnp.full((num_classes - 1,), 1.0 - alpha, jnp.float32),
        ])
    p2 = preds.reshape(-1, preds.shape[-1]).astype(jnp.float32)
    l1 = labels.reshape(-1)
    sm = jax.nn.softmax(p2, axis=1)
    logsm = jnp.log(sm)
    p_t = jnp.take_along_axis(sm, l1[:, None], axis=1)[:, 0]
    logp_t = jnp.take_along_axis(logsm, l1[:, None], axis=1)[:, 0]
    a_t = alpha_vec[l1]
    loss = a_t * (-((1.0 - p_t) ** gamma) * logp_t)
    return loss.mean() if size_average else loss.sum()


if __name__ == "__main__":
    B, N, C = 2, 8, 3
    key = jax.random.PRNGKey(0)
    k1, k2 = jax.random.split(key)
    preds = jax.random.normal(k1, (B, N, C), jnp.float32)
    labels = jax.random.randint(k2, (B, N), 0, C, jnp.int32)

    # scalar alpha, mean reduction (default FocalLoss config)
    out = focal_loss(preds, labels, alpha=0.25, gamma=2, num_classes=C,
                     size_average=True)
    out = jax.block_until_ready(out)
    ref = _focal_loss_ref(preds, labels, alpha=0.25, gamma=2, num_classes=C,
                          size_average=True)
    assert jnp.allclose(out, ref, rtol=1e-5, atol=1e-5), (out, ref)

    # list-valued alpha, sum reduction (exercises baked alpha where-chain)
    alpha_list = [0.25, 0.5, 0.25]
    out2 = focal_loss(preds, labels, alpha=alpha_list, gamma=2, num_classes=C,
                      size_average=False)
    out2 = jax.block_until_ready(out2)
    ref2 = _focal_loss_ref(preds, labels, alpha=alpha_list, gamma=2,
                           num_classes=C, size_average=False)
    assert jnp.allclose(out2, ref2, rtol=1e-5, atol=1e-5), (out2, ref2)

    # multi-block + padded-tail masking: M = 1500 rows with block_rows = 1024
    # -> 2 grid steps, 548 padded rows masked via label = -1.
    k3, k4 = jax.random.split(k2)
    preds3 = jax.random.normal(k3, (5, 300, C), jnp.float32)
    labels3 = jax.random.randint(k4, (5, 300), 0, C, jnp.int32)
    out3 = focal_loss(preds3, labels3, alpha=0.25, gamma=2, num_classes=C,
                      size_average=True, block_rows=1024)
    out3 = jax.block_until_ready(out3)
    ref3 = _focal_loss_ref(preds3, labels3, alpha=0.25, gamma=2, num_classes=C,
                           size_average=True)
    assert jnp.allclose(out3, ref3, rtol=1e-5, atol=1e-5), (out3, ref3)

    print("KERNEL_OK")
</pallas_src>

<mosaic_0001>
module attributes {stable_mosaic.version = 11 : i64} {
  func.func @_focal_loss_kernel(%arg0: i32, %arg1: memref<3x8x128xf32, #tpu.memory_space<vmem>>, %arg2: memref<8x128xi32, #tpu.memory_space<vmem>>, %arg3: memref<1x8x128xf32, #tpu.memory_space<vmem>>) attributes {dimension_semantics = [#tpu.dimension_semantics<parallel>], iteration_bounds = array<i64: 1>, scalar_prefetch = 0 : i64, scratch_operands = 0 : i64, tpu.core_type = #tpu.core_type<tc>, window_params = [{transform_indices = @transform_0, window_bounds = array<i64: 3, 8, 128>}, {transform_indices = @transform_1, window_bounds = array<i64: 8, 128>}, {transform_indices = @transform_2, window_bounds = array<i64: 1, 8, 128>}]} {
    %c0 = arith.constant 0 : index
    %c0_0 = arith.constant 0 : index
    %0 = vector.load %arg2[%c0, %c0_0] : memref<8x128xi32, #tpu.memory_space<vmem>>, vector<8x128xi32>
    %c0_1 = arith.constant 0 : index
    %c0_2 = arith.constant 0 : index
    %c0_3 = arith.constant 0 : index
    %1 = vector.load %arg1[%c0_1, %c0_2, %c0_3] : memref<3x8x128xf32, #tpu.memory_space<vmem>>, vector<1x8x128xf32>
    %2 = vector.shape_cast %1 : vector<1x8x128xf32> to vector<8x128xf32>
    %c1 = arith.constant 1 : index
    %c0_4 = arith.constant 0 : index
    %c0_5 = arith.constant 0 : index
    %3 = vector.load %arg1[%c1, %c0_4, %c0_5] : memref<3x8x128xf32, #tpu.memory_space<vmem>>, vector<1x8x128xf32>
    %4 = vector.shape_cast %3 : vector<1x8x128xf32> to vector<8x128xf32>
    %c2 = arith.constant 2 : index
    %c0_6 = arith.constant 0 : index
    %c0_7 = arith.constant 0 : index
    %5 = vector.load %arg1[%c2, %c0_6, %c0_7] : memref<3x8x128xf32, #tpu.memory_space<vmem>>, vector<1x8x128xf32>
    %6 = vector.shape_cast %5 : vector<1x8x128xf32> to vector<8x128xf32>
    %7 = arith.maximumf %2, %4 : vector<8x128xf32>
    %8 = arith.maximumf %7, %6 : vector<8x128xf32>
    %9 = arith.subf %2, %8 : vector<8x128xf32>
    %10 = math.exp %9 : vector<8x128xf32>
    %11 = arith.subf %4, %8 : vector<8x128xf32>
    %12 = math.exp %11 : vector<8x128xf32>
    %13 = arith.subf %6, %8 : vector<8x128xf32>
    %14 = math.exp %13 : vector<8x128xf32>
    %15 = arith.addf %10, %12 : vector<8x128xf32>
    %16 = arith.addf %15, %14 : vector<8x128xf32>
    %c1_i32 = arith.constant 1 : i32
    %17 = vector.broadcast %c1_i32 : i32 to vector<8x128xi32>
    %18 = arith.cmpi eq, %0, %17 : vector<8x128xi32>
    %19 = arith.select %18, %4, %2 : vector<8x128xi1>, vector<8x128xf32>
    %20 = arith.select %18, %12, %10 : vector<8x128xi1>, vector<8x128xf32>
    %cst = arith.constant 7.500000e-01 : f32
    %cst_8 = arith.constant 2.500000e-01 : f32
    %21 = vector.broadcast %cst : f32 to vector<8x128xf32>
    %22 = vector.broadcast %cst_8 : f32 to vector<8x128xf32>
    %23 = arith.select %18, %21, %22 : vector<8x128xi1>, vector<8x128xf32>
    %c2_i32 = arith.constant 2 : i32
    %24 = vector.broadcast %c2_i32 : i32 to vector<8x128xi32>
    %25 = arith.cmpi eq, %0, %24 : vector<8x128xi32>
    %26 = arith.select %25, %6, %19 : vector<8x128xi1>, vector<8x128xf32>
    %27 = arith.select %25, %14, %20 : vector<8x128xi1>, vector<8x128xf32>
    %cst_9 = arith.constant 7.500000e-01 : f32
    %28 = vector.broadcast %cst_9 : f32 to vector<8x128xf32>
    %29 = arith.select %25, %28, %23 : vector<8x128xi1>, vector<8x128xf32>
    %30 = arith.subf %26, %8 : vector<8x128xf32>
    %31 = math.log %16 : vector<8x128xf32>
    %32 = arith.subf %30, %31 : vector<8x128xf32>
    %33 = arith.divf %27, %16 : vector<8x128xf32>
    %cst_10 = arith.constant 1.000000e+00 : f32
    %34 = vector.broadcast %cst_10 : f32 to vector<8x128xf32>
    %35 = arith.subf %34, %33 : vector<8x128xf32>
    %36 = arith.mulf %35, %35 : vector<8x128xf32>
    %37 = arith.mulf %29, %36 : vector<8x128xf32>
    %cst_11 = arith.constant 0.000000e+00 : f32
    %38 = vector.broadcast %cst_11 : f32 to vector<8x128xf32>
    %39 = arith.subf %38, %32 : vector<8x128xf32>
    %40 = arith.mulf %37, %39 : vector<8x128xf32>
    %c0_i32 = arith.constant 0 : i32
    %41 = vector.broadcast %c0_i32 : i32 to vector<8x128xi32>
    %42 = arith.cmpi sge, %0, %41 : vector<8x128xi32>
    %cst_12 = arith.constant 0.000000e+00 : f32
    %43 = vector.broadcast %cst_12 : f32 to vector<8x128xf32>
    %44 = arith.select %42, %40, %43 : vector<8x128xi1>, vector<8x128xf32>
    %45 = vector.shape_cast %44 : vector<8x128xf32> to vector<1x8x128xf32>
    %cst_13 = arith.constant dense<0.000000e+00> : vector<8x128xf32>
    %46 = vector.multi_reduction <add>, %45, %cst_13 [0] : vector<1x8x128xf32> to vector<8x128xf32>
    %47 = vector.shape_cast %46 : vector<8x128xf32> to vector<1x8x128xf32>
    %c0_14 = arith.constant 0 : index
    %c0_15 = arith.constant 0 : index
    %c0_16 = arith.constant 0 : index
    %48 = vector.load %arg3[%c0_14, %c0_15, %c0_16] : memref<1x8x128xf32, #tpu.memory_space<vmem>>, vector<1x8x128xf32>
    tpu.vector_store %arg3[%c0_14, %c0_15, %c0_16], %47 {strides = array<i32>} : memref<1x8x128xf32, #tpu.memory_space<vmem>>, vector<1x8x128xf32>,
    return
  }
  func.func @transform_0(%arg0: i32) -> (i32, i32, i32) {
    %c0_i32 = arith.constant 0 : i32
    %c0_i32_0 = arith.constant 0 : i32
    %c0_i32_1 = arith.constant 0 : i32
    return %c0_i32, %arg0, %c0_i32_0 : i32, i32, i32
  }
  func.func @transform_1(%arg0: i32) -> (i32, i32) {
    %c0_i32 = arith.constant 0 : i32
    %c0_i32_0 = arith.constant 0 : i32
    return %arg0, %c0_i32 : i32, i32
  }
  func.func @transform_2(%arg0: i32) -> (i32, i32, i32) {
    %c0_i32 = arith.constant 0 : i32
    %c0_i32_0 = arith.constant 0 : i32
    %c0_i32_1 = arith.constant 0 : i32
    return %arg0, %c0_i32, %c0_i32_0 : i32, i32, i32
  }
}

</mosaic_0001>

<llo_original>
// kernel: tpu_custom_call.1
$region0: #{tpu_custom_call.1}
  #allocation0 [shape = 'u32[]', space=smem, size = 0x4, offset = 0x4, fixed_abs, tag = 'smem constant byte address 0x4 - core index']
  #allocation1 [shape = 'u32[144,128]{1,0:T(1,128)}', space=vmem, size = 0x12000, scoped, tag = 'internal scratch']
  %s0 = inlined_call_operand.hbm [shape: f32[3,8,128], index: 0, kind: input, shape index: {}]
  %s1 = inlined_call_operand.hbm [shape: s32[8,128], index: 1, kind: input, shape index: {}]
  %s2 = inlined_call_operand.hbm [shape: f32[1,8,128], index: 2, kind: output, shape index: {}]
  %s3 = sld [smem:[#allocation0]]
  $region26: #{tpu_custom_call.1} parent=0
    _
  %s5 = ssub.s32 1, %s3
  %s6 = scalar_select 0, %s5, %s3
  $region1: #{tpu_custom_call.1} parent=0
    #allocation2 [shape = 'u8[12288]{0}', space=vmem, size = 0x3000, scoped, tag = 'input window, operand 0, single buffered']
    #allocation3 [shape = 's32[1]{0}', space=sflag, size = 0x4, scoped, tag = 'scoped memory for tpu_custom_call.1']
    #allocation4 [shape = 's32[1]{0}', space=sflag, size = 0x4, scoped, tag = 'scoped memory for tpu_custom_call.1']
    #allocation5 [shape = 'u8[4096]{0}', space=vmem, size = 0x1000, scoped, tag = 'input window, operand 1, single buffered']
    #allocation6 [shape = 's32[1]{0}', space=sflag, size = 0x4, scoped, tag = 'scoped memory for tpu_custom_call.1']
    #allocation7 [shape = 'u8[4096]{0}', space=vmem, size = 0x1000, scoped, tag = 'output window, operand 0, single buffered']
    %7 = vsyncpa [#allocation3], 0
    %8 = vsyncpa [#allocation6], 0
    %9 = vsyncpa [#allocation4], 0
    // Predicated region
    $region2: #{tpu_custom_call.1} parent=1 // pred_check
      _
    $region3: #{tpu_custom_call.1} parent=1 // pred_check_branch
      %11 = sbr.rel (0) target = $region5
    $region4: #{tpu_custom_call.1} parent=1 // pred_region
      %s13 = ssub.s32 384, 384
      %14 = vsyncadd [#allocation3], %s13
      %s15 = sshll.u32 [#allocation2], 4
      %s16 = int_to_ptr.vmem [resolvable:$true] %s15
      %21 = dma.hbm_to_vmem [thread:$0]  %s0, 384, %s16, [#allocation3], 128, 128, 8
    $region5: #{tpu_custom_call.1} parent=1 // pred_fallthru
      _
    // Predicated region
    $region6: #{tpu_custom_call.1} parent=1 // pred_check
      _
    $region7: #{tpu_custom_call.1} parent=1 // pred_check_branch
      %23 = sbr.rel (0) target = $region9
    $region8: #{tpu_custom_call.1} parent=1 // pred_region
      %s25 = ssub.s32 128, 128
      %26 = vsyncadd [#allocation6], %s25
      %s28 = sshll.u32 [#allocation5], 4
      %s29 = int_to_ptr.vmem [resolvable:$true] %s28
      %31 = dma.hbm_to_vmem [thread:$0]  %s1, 128, %s29, [#allocation6]
    $region9: #{tpu_custom_call.1} parent=1 // pred_fallthru
      _
    // Predicated region
    $region10: #{tpu_custom_call.1} parent=1 // pred_check
      _
    $region11: #{tpu_custom_call.1} parent=1 // pred_check_branch
      %33 = sbr.rel (0) target = $region13
    $region12: #{tpu_custom_call.1} parent=1 // pred_region
      %34 = dma.done [#allocation3], 384
    $region13: #{tpu_custom_call.1} parent=1 // pred_fallthru
      _
    // Predicated region
    $region14: #{tpu_custom_call.1} parent=1 // pred_check
      _
    $region15: #{tpu_custom_call.1} parent=1 // pred_check_branch
      %36 = sbr.rel (0) target = $region17
    $region16: #{tpu_custom_call.1} parent=1 // pred_region
      %37 = dma.done [#allocation6], 128
    $region17: #{tpu_custom_call.1} parent=1 // pred_fallthru
      _
    %v38 = vld [vmem:[#allocation5] sm:$0xff]
    %v39 = vld [vmem:[#allocation2] sm:$0xff]
    %s40 = scalar_lea.vmem [#allocation2], 8
    %v41 = vld [vmem:[%s40] sm:$0xff]
    %s42 = scalar_lea.vmem [#allocation2], 16
    %v43 = vld [vmem:[%s42] sm:$0xff]
    %v44 = vmax.f32 %v39, %v41
    %v45 = vmax.f32 %v44, %v43
    %v46 = vsub.f32 %v39, %v45
    %v47 = vmul.f32 %v46, 1.442695
    %v48 = vpow.pop %v47
    %v49 = vsub.f32 %v41, %v45
    %v50 = vmul.f32 %v49, 1.442695
    %v51 = vpow.pop %v50
    %v52 = vsub.f32 %v43, %v45
    %v53 = vmul.f32 %v52, 1.442695
    %v54 = vpow.pop %v53
    %v55 = vadd.f32 %v48, %v51
    %v56 = vadd.f32 %v55, %v54
    %vm57 = vcmp.eq.s32.totalorder %v38, 1
    %v58 = vsel %vm57, %v41, %v39
    %v59 = vsel %vm57, %v51, %v48
    %v60 = vsel %vm57, 0.75, 0.25
    %vm61 = vcmp.eq.s32.totalorder %v38, 2
    %v62 = vsel %vm61, %v43, %v58
    %v63 = vsel %vm61, %v54, %v59
    %v64 = vsel %vm61, 0.75, %v60
    %v65 = vsub.f32 %v62, %v45
    %v66 = vlog2.pop %v56
    %v67 = vmul.f32 %v66, 0.6931472
    %v68 = vsub.f32 %v65, %v67
    %v69 = vrcp.pop %v56
    %v70 = vmul.f32 %v63, %v69
    %v71 = vsub.f32 1.0, %v70
    %v72 = vmul.f32 %v71, %v71
    %v73 = vmul.f32 %v64, %v72
    %v74 = vsub.f32 0.0, %v68
    %v75 = vmul.f32 %v73, %v74
    %vm76 = vcmp.ge.s32.totalorder %v38, 0
    %v77 = vsel %vm76, %v75, 0.0
    %v78 = vadd.f32 %v77, 0.0
    %79 = vst [vmem:[#allocation7] sm:$0xff] %v78
    // Predicated region
    $region18: #{tpu_custom_call.1} parent=1 // pred_check
      _
    $region19: #{tpu_custom_call.1} parent=1 // pred_check_branch
      %81 = sbr.rel (0) target = $region21
    $region20: #{tpu_custom_call.1} parent=1 // pred_region
      %s83 = ssub.s32 128, 128
      %84 = vsyncadd [#allocation4], %s83
      %s86 = sshll.u32 [#allocation7], 4
      %s87 = int_to_ptr.vmem [resolvable:$true] %s86
      %89 = dma.vmem_to_hbm [thread:$0]  %s87, 128, %s2, [#allocation4]
    $region21: #{tpu_custom_call.1} parent=1 // pred_fallthru
      _
    // Predicated region
    $region22: #{tpu_custom_call.1} parent=1 // pred_check
      _
    $region23: #{tpu_custom_call.1} parent=1 // pred_check_branch
      %91 = sbr.rel (0) target = $region25
    $region24: #{tpu_custom_call.1} parent=1 // pred_region
      %92 = dma.done [#allocation4], 128
    $region25: #{tpu_custom_call.1} parent=1 // pred_fallthru
      _
    %93 = vsyncpa [#allocation3], 1
    %94 = vsyncpa [#allocation6], 1
    %95 = vsyncpa [#allocation4], 1

</llo_original>
